<compile_context>
chip_gen: v7x
topology: tpu7x:2x2x1
jax: 0.10.0
libtpu: 0.0.40
codegen_flags: <defaults>
</compile_context>

<pallas_src>
import math
import functools

import jax
import jax.numpy as jnp
from jax import lax
from jax.experimental import pallas as pl
from jax.experimental.pallas import tpu as pltpu


def _round_up(x, m):
    return ((x + m - 1) // m) * m


def _pad_to(x, shape):
    pads = [(0, t - s) for s, t in zip(x.shape, shape)]
    return jnp.pad(x, pads)


# ----------------------------- Pallas kernel ------------------------------ #
def _conv_nj_kernel(p_ref, wmu_ref, wvar_ref, bmu_ref, bvar_ref,
                    z_ref, eps_ref, out_ref):
    # p_ref:   (TS, Kp)  im2col patch tile (bf16 or f32)
    # wmu_ref: (Kp, Op)  flattened weight_mu^T            (resident across grid)
    # wvar_ref:(Kp, Op)  flattened exp(weight_logvar)^T   (resident across grid)
    # bmu_ref: (1, Op)   bias_mu                          (f32)
    # bvar_ref:(1, Op)   exp(bias_logvar)                 (f32)
    # z_ref:   (1, Op)   per-batch multiplicative noise z (f32, broadcasts)
    # eps_ref: (TS, Op)  N(0,1) noise for the output sample (f32)
    p = p_ref[...]

    # mean path: conv(x, weight_mu) + bias_mu
    mu_act = jnp.dot(p, wmu_ref[...],
                     preferred_element_type=jnp.float32) + bmu_ref[...]

    # variance path: conv(x^2, exp(weight_logvar)) + exp(bias_logvar)
    p32 = p.astype(jnp.float32)
    psq = (p32 * p32).astype(p.dtype)
    var_act = jnp.dot(psq, wvar_ref[...],
                      preferred_element_type=jnp.float32) + bvar_ref[...]

    z = z_ref[...]                                       # (1, Op) -> broadcasts
    # reparameterize(mu_act * z, log(var_act * z^2)):
    #   exp(0.5*log(var_act*z^2)) == sqrt(var_act) * |z|   (var_act >= 0)
    # single EUP op; avoids -inf intermediates on zero-padded output channels.
    std = jnp.abs(z) * jnp.sqrt(var_act)
    out_ref[...] = mu_act * z + eps_ref[...] * std


# ------------------------------ JAX wrapper ------------------------------- #
def conv2d_group_nj_forward(x, weight_mu, weight_logvar, bias_mu, bias_logvar,
                            z_mu, z_logvar, eps_z, eps_out, *,
                            tm=512, use_bf16=True):
    """Forward pass of Conv2dGroupNJ (training / sampling path).

    x:        (N, C, H, W)        float32, NCHW
    weight_*: (O, C, KH, KW)
    bias_*:   (O,)
    z_*:      (O,)
    eps_z:    (N, O)              N(0,1) noise for z
    eps_out:  (N, O, Ho, Wo)      N(0,1) noise for the output sample
    returns:  (N, O, Ho, Wo)      NCHW, float32
    """
    N, C, H, W = x.shape
    O, _, KH, KW = weight_mu.shape
    Ho, Wo = H - KH + 1, W - KW + 1
    S = Ho * Wo                       # output pixels per batch element
    K = C * KH * KW
    mxu_dtype = jnp.bfloat16 if use_bf16 else jnp.float32

    # --- glue: im2col (stride=1, pad=0, dilation=1, groups=1), per batch ---
    # TODO(synk): for large KH*KW an implicit-GEMM kernel (haloed x tiles + an
    # in-kernel (kh,kw) loop) would cut the dominant HBM stream by ~KH*KW; the
    # explicit patch matrix is kept here for simplicity/robustness.
    cols = []
    for kh in range(KH):
        for kw in range(KW):
            cols.append(x[:, :, kh:kh + Ho, kw:kw + Wo])        # (N, C, Ho, Wo)
    patches = jnp.stack(cols, axis=2)                           # (N, C, KH*KW, Ho, Wo)
    patches = patches.reshape(N, K, Ho, Wo)                     # K-order: (c, kh, kw)
    patches = patches.transpose(0, 2, 3, 1).reshape(N, S, K)    # (N, S, K)

    # --- glue: parameter prep ---
    wmu_t = weight_mu.reshape(O, K).T                           # (K, O)
    wvar_t = jnp.exp(weight_logvar).reshape(O, K).T             # (K, O)
    bmu = bias_mu.reshape(1, O)
    bvar = jnp.exp(bias_logvar).reshape(1, O)

    # z = reparameterize(z_mu.repeat(B,1), z_logvar.repeat(B,1), sampling=True)
    # Kept as a tiny (N, 1, O) array; the kernel broadcasts it per batch, so we
    # never materialize / stream the (N*S, O) repeat.
    z = z_mu[None, :] + eps_z * jnp.exp(0.5 * z_logvar)[None, :]   # (N, O)
    eps_rows = eps_out.transpose(0, 2, 3, 1).reshape(N, S, O)      # (N, S, O)

    # --- padding to TPU-friendly tiles ---
    TS = min(tm, _round_up(S, 8))            # spatial tile (sublane-aligned)
    Sp = _round_up(S, TS)
    Kp = max(128, _round_up(K, 128))
    Op = max(128, _round_up(O, 128))

    patches_p = _pad_to(patches, (N, Sp, Kp)).astype(mxu_dtype)
    wmu_p = _pad_to(wmu_t, (Kp, Op)).astype(mxu_dtype)
    wvar_p = _pad_to(wvar_t, (Kp, Op)).astype(mxu_dtype)
    bmu_p = _pad_to(bmu, (1, Op))
    bvar_p = _pad_to(bvar, (1, Op))
    z_p = _pad_to(z.reshape(N, 1, O), (N, 1, Op))
    eps_p = _pad_to(eps_rows, (N, Sp, Op))

    # --- VMEM budget (double-buffered blocks) + scheduler cost hint ---
    pb = 2 if use_bf16 else 4
    step_bytes = 2 * (TS * Kp * pb            # patch tile
                      + 2 * Kp * Op * pb      # two resident weight matrices
                      + 2 * Op * 4            # biases
                      + Op * 4                # z row
                      + 2 * TS * Op * 4)      # eps tile + out tile
    vmem_limit = int(min(max(2 * step_bytes, 16 * 1024 * 1024),
                         64 * 1024 * 1024))
    M = N * S
    cost = pl.CostEstimate(
        flops=4 * M * K * O + 6 * M * O,
        transcendentals=M * O,                               # one sqrt per output
        bytes_accessed=(M * K * pb + 2 * K * O * pb          # patches, weights
                        + M * O * 4 + M * O * 4              # eps, out
                        + N * O * 4 + 2 * O * 4))            # z, biases

    grid = (N, Sp // TS)
    out_p = pl.pallas_call(
        _conv_nj_kernel,
        out_shape=jax.ShapeDtypeStruct((N, Sp, Op), jnp.float32),
        grid_spec=pltpu.PrefetchScalarGridSpec(
            num_scalar_prefetch=0,
            grid=grid,
            in_specs=[
                pl.BlockSpec((None, TS, Kp), lambda n, s: (n, s, 0)),  # patches
                pl.BlockSpec((Kp, Op), lambda n, s: (0, 0)),           # weight_mu^T
                pl.BlockSpec((Kp, Op), lambda n, s: (0, 0)),           # weight_var^T
                pl.BlockSpec((1, Op), lambda n, s: (0, 0)),            # bias_mu
                pl.BlockSpec((1, Op), lambda n, s: (0, 0)),            # bias_var
                pl.BlockSpec((None, 1, Op), lambda n, s: (n, 0, 0)),   # z (per batch)
                pl.BlockSpec((None, TS, Op), lambda n, s: (n, s, 0)),  # eps
            ],
            out_specs=pl.BlockSpec((None, TS, Op), lambda n, s: (n, s, 0)),
        ),
        compiler_params=pltpu.CompilerParams(
            dimension_semantics=("parallel", "parallel"),
            vmem_limit_bytes=vmem_limit),
        cost_estimate=cost,
    )(patches_p, wmu_p, wvar_p, bmu_p, bvar_p, z_p, eps_p)

    out = out_p[:, :S, :O].reshape(N, Ho, Wo, O).transpose(0, 3, 1, 2)  # NCHW
    return out


# --------------------------- pure-JAX reference ---------------------------- #
def _reference(x, weight_mu, weight_logvar, bias_mu, bias_logvar,
               z_mu, z_logvar, eps_z, eps_out):
    dn = ('NCHW', 'OIHW', 'NCHW')
    mu_act = lax.conv_general_dilated(x, weight_mu, (1, 1), 'VALID',
                                      dimension_numbers=dn)
    mu_act = mu_act + bias_mu[None, :, None, None]
    var_act = lax.conv_general_dilated(x * x, jnp.exp(weight_logvar), (1, 1),
                                       'VALID', dimension_numbers=dn)
    var_act = var_act + jnp.exp(bias_logvar)[None, :, None, None]
    z = z_mu[None, :] + eps_z * jnp.exp(0.5 * z_logvar)[None, :]
    z4 = z[:, :, None, None]
    return mu_act * z4 + eps_out * jnp.exp(0.5 * jnp.log(var_act * z4 * z4))


# --------------------------------- main ------------------------------------ #
if __name__ == "__main__":
    key = jax.random.PRNGKey(0)
    (k_x, k_w, k_wlv, k_blv, k_zmu, k_zlv, k_ez, k_eo) = jax.random.split(key, 8)

    # Small shapes consistent with the module
    N, C, H, W = 2, 4, 16, 16
    O, KH, KW = 8, 3, 3

    x = jax.random.normal(k_x, (N, C, H, W), jnp.float32)

    # Deterministic parameter init mirroring _ConvNdGroupNJ.reset_parameters
    n_fan = C * KH * KW
    stdv = 1.0 / math.sqrt(n_fan)
    weight_mu = jax.random.uniform(k_w, (O, C, KH, KW), jnp.float32, -stdv, stdv)
    weight_logvar = -9.0 + 0.01 * jax.random.normal(k_wlv, (O, C, KH, KW), jnp.float32)
    bias_mu = jnp.zeros((O,), jnp.float32)
    bias_logvar = -9.0 + 0.01 * jax.random.normal(k_blv, (O,), jnp.float32)
    z_mu = 1.0 + 0.01 * jax.random.normal(k_zmu, (O,), jnp.float32)
    z_logvar = -9.0 + 0.01 * jax.random.normal(k_zlv, (O,), jnp.float32)

    # Noise for the two reparameterize() calls (training path)
    Ho, Wo = H - KH + 1, W - KW + 1
    eps_z = jax.random.normal(k_ez, (N, O), jnp.float32)
    eps_out = jax.random.normal(k_eo, (N, O, Ho, Wo), jnp.float32)

    args = (x, weight_mu, weight_logvar, bias_mu, bias_logvar,
            z_mu, z_logvar, eps_z, eps_out)

    ref = _reference(*args)

    # exact-precision path (f32 MXU inputs): tight tolerance
    fwd_f32 = jax.jit(functools.partial(conv2d_group_nj_forward,
                                        tm=512, use_bf16=False))
    out_f32 = jax.block_until_ready(fwd_f32(*args))
    assert out_f32.shape == (N, O, Ho, Wo)
    assert jnp.allclose(out_f32, ref, atol=1e-4, rtol=1e-4), \
        f"f32 max abs err {jnp.max(jnp.abs(out_f32 - ref))}"

    # fast path (bf16 MXU inputs, f32 accumulate + f32 epilogue): looser tolerance
    fwd_bf16 = jax.jit(functools.partial(conv2d_group_nj_forward,
                                         tm=512, use_bf16=True))
    out_bf16 = jax.block_until_ready(fwd_bf16(*args))
    assert out_bf16.shape == (N, O, Ho, Wo)
    assert jnp.allclose(out_bf16, ref, atol=2e-2, rtol=2e-2), \
        f"bf16 max abs err {jnp.max(jnp.abs(out_bf16 - ref))}"

    print("KERNEL_OK")
</pallas_src>

<mosaic_0001>
module attributes {stable_mosaic.version = 11 : i64} {
  func.func @_conv_nj_kernel(%arg0: i32, %arg1: i32, %arg2: memref<1x200x128xf32, #tpu.memory_space<vmem>>, %arg3: memref<128x128xf32, #tpu.memory_space<vmem>>, %arg4: memref<128x128xf32, #tpu.memory_space<vmem>>, %arg5: memref<1x128xf32, #tpu.memory_space<vmem>>, %arg6: memref<1x128xf32, #tpu.memory_space<vmem>>, %arg7: memref<1x1x128xf32, #tpu.memory_space<vmem>>, %arg8: memref<1x200x128xf32, #tpu.memory_space<vmem>>, %arg9: memref<1x200x128xf32, #tpu.memory_space<vmem>>) attributes {dimension_semantics = [#tpu.dimension_semantics<parallel>, #tpu.dimension_semantics<parallel>], iteration_bounds = array<i64: 2, 1>, scalar_prefetch = 0 : i64, scratch_operands = 0 : i64, tpu.core_type = #tpu.core_type<tc>, window_params = [{transform_indices = @transform_0, window_bounds = array<i64: 1, 200, 128>}, {pipeline_mode = #tpu.pipeline_mode<synchronous>, transform_indices = @transform_1, window_bounds = array<i64: 128, 128>}, {pipeline_mode = #tpu.pipeline_mode<synchronous>, transform_indices = @transform_2, window_bounds = array<i64: 128, 128>}, {pipeline_mode = #tpu.pipeline_mode<synchronous>, transform_indices = @transform_3, window_bounds = array<i64: 1, 128>}, {pipeline_mode = #tpu.pipeline_mode<synchronous>, transform_indices = @transform_4, window_bounds = array<i64: 1, 128>}, {transform_indices = @transform_5, window_bounds = array<i64: 1, 1, 128>}, {transform_indices = @transform_6, window_bounds = array<i64: 1, 200, 128>}, {transform_indices = @transform_7, window_bounds = array<i64: 1, 200, 128>}]} {
    %c0 = arith.constant 0 : index
    %c0_0 = arith.constant 0 : index
    %c0_1 = arith.constant 0 : index
    %0 = vector.load %arg2[%c0, %c0_0, %c0_1] : memref<1x200x128xf32, #tpu.memory_space<vmem>>, vector<1x200x128xf32>
    %1 = vector.shape_cast %0 : vector<1x200x128xf32> to vector<200x128xf32>
    %c0_2 = arith.constant 0 : index
    %c0_3 = arith.constant 0 : index
    %2 = vector.load %arg3[%c0_2, %c0_3] : memref<128x128xf32, #tpu.memory_space<vmem>>, vector<128x128xf32>
    %cst = arith.constant dense<0.000000e+00> : vector<200x128xf32>
    %3 = tpu.matmul %1, %2, %cst {dimension_numbers = #tpu.dot_dimension_numbers<[1], [0], [0], [1], [0, 0, 1, 1], [], []>} : vector<200x128xf32>, vector<128x128xf32>, vector<200x128xf32> -> vector<200x128xf32>
    %c0_4 = arith.constant 0 : index
    %c0_5 = arith.constant 0 : index
    %4 = vector.load %arg5[%c0_4, %c0_5] : memref<1x128xf32, #tpu.memory_space<vmem>>, vector<1x128xf32>
    %5 = vector.broadcast %4 : vector<1x128xf32> to vector<200x128xf32>
    %6 = arith.addf %3, %5 : vector<200x128xf32>
    %7 = arith.mulf %1, %1 : vector<200x128xf32>
    %c0_6 = arith.constant 0 : index
    %c0_7 = arith.constant 0 : index
    %8 = vector.load %arg4[%c0_6, %c0_7] : memref<128x128xf32, #tpu.memory_space<vmem>>, vector<128x128xf32>
    %cst_8 = arith.constant dense<0.000000e+00> : vector<200x128xf32>
    %9 = tpu.matmul %7, %8, %cst_8 {dimension_numbers = #tpu.dot_dimension_numbers<[1], [0], [0], [1], [0, 0, 1, 1], [], []>} : vector<200x128xf32>, vector<128x128xf32>, vector<200x128xf32> -> vector<200x128xf32>
    %c0_9 = arith.constant 0 : index
    %c0_10 = arith.constant 0 : index
    %10 = vector.load %arg6[%c0_9, %c0_10] : memref<1x128xf32, #tpu.memory_space<vmem>>, vector<1x128xf32>
    %11 = vector.broadcast %10 : vector<1x128xf32> to vector<200x128xf32>
    %12 = arith.addf %9, %11 : vector<200x128xf32>
    %c0_11 = arith.constant 0 : index
    %c0_12 = arith.constant 0 : index
    %c0_13 = arith.constant 0 : index
    %13 = vector.load %arg7[%c0_11, %c0_12, %c0_13] : memref<1x1x128xf32, #tpu.memory_space<vmem>>, vector<1x1x128xf32>
    %14 = vector.shape_cast %13 : vector<1x1x128xf32> to vector<1x128xf32>
    %15 = math.absf %14 : vector<1x128xf32>
    %16 = math.sqrt %12 : vector<200x128xf32>
    %17 = vector.broadcast %15 : vector<1x128xf32> to vector<200x128xf32>
    %18 = arith.mulf %17, %16 : vector<200x128xf32>
    %19 = vector.broadcast %14 : vector<1x128xf32> to vector<200x128xf32>
    %20 = arith.mulf %6, %19 : vector<200x128xf32>
    %c0_14 = arith.constant 0 : index
    %c0_15 = arith.constant 0 : index
    %c0_16 = arith.constant 0 : index
    %21 = vector.load %arg8[%c0_14, %c0_15, %c0_16] : memref<1x200x128xf32, #tpu.memory_space<vmem>>, vector<1x200x128xf32>
    %22 = vector.shape_cast %21 : vector<1x200x128xf32> to vector<200x128xf32>
    %23 = arith.mulf %22, %18 : vector<200x128xf32>
    %24 = arith.addf %20, %23 : vector<200x128xf32>
    %c0_17 = arith.constant 0 : index
    %c0_18 = arith.constant 0 : index
    %c0_19 = arith.constant 0 : index
    %25 = vector.load %arg9[%c0_17, %c0_18, %c0_19] : memref<1x200x128xf32, #tpu.memory_space<vmem>>, vector<1x200x128xf32>
    %26 = vector.shape_cast %25 : vector<1x200x128xf32> to vector<200x128xf32>
    %27 = vector.shape_cast %24 : vector<200x128xf32> to vector<1x200x128xf32>
    tpu.vector_store %arg9[%c0_17, %c0_18, %c0_19], %27 {strides = array<i32>} : memref<1x200x128xf32, #tpu.memory_space<vmem>>, vector<1x200x128xf32>,
    return
  }
  func.func @transform_0(%arg0: i32, %arg1: i32) -> (i32, i32, i32) {
    %c0_i32 = arith.constant 0 : i32
    %c0_i32_0 = arith.constant 0 : i32
    return %arg0, %arg1, %c0_i32 : i32, i32, i32
  }
  func.func @transform_1(%arg0: i32, %arg1: i32) -> (i32, i32) {
    %c0_i32 = arith.constant 0 : i32
    %c0_i32_0 = arith.constant 0 : i32
    %c0_i32_1 = arith.constant 0 : i32
    return %c0_i32, %c0_i32_0 : i32, i32
  }
  func.func @transform_2(%arg0: i32, %arg1: i32) -> (i32, i32) {
    %c0_i32 = arith.constant 0 : i32
    %c0_i32_0 = arith.constant 0 : i32
    %c0_i32_1 = arith.constant 0 : i32
    return %c0_i32, %c0_i32_0 : i32, i32
  }
  func.func @transform_3(%arg0: i32, %arg1: i32) -> (i32, i32) {
    %c0_i32 = arith.constant 0 : i32
    %c0_i32_0 = arith.constant 0 : i32
    %c0_i32_1 = arith.constant 0 : i32
    return %c0_i32, %c0_i32_0 : i32, i32
  }
  func.func @transform_4(%arg0: i32, %arg1: i32) -> (i32, i32) {
    %c0_i32 = arith.constant 0 : i32
    %c0_i32_0 = arith.constant 0 : i32
    %c0_i32_1 = arith.constant 0 : i32
    return %c0_i32, %c0_i32_0 : i32, i32
  }
  func.func @transform_5(%arg0: i32, %arg1: i32) -> (i32, i32, i32) {
    %c0_i32 = arith.constant 0 : i32
    %c0_i32_0 = arith.constant 0 : i32
    %c0_i32_1 = arith.constant 0 : i32
    return %arg0, %c0_i32, %c0_i32_0 : i32, i32, i32
  }
  func.func @transform_6(%arg0: i32, %arg1: i32) -> (i32, i32, i32) {
    %c0_i32 = arith.constant 0 : i32
    %c0_i32_0 = arith.constant 0 : i32
    return %arg0, %arg1, %c0_i32 : i32, i32, i32
  }
  func.func @transform_7(%arg0: i32, %arg1: i32) -> (i32, i32, i32) {
    %c0_i32 = arith.constant 0 : i32
    %c0_i32_0 = arith.constant 0 : i32
    return %arg0, %arg1, %c0_i32 : i32, i32, i32
  }
}

</mosaic_0001>

<llo_original>
// kernel: conv2d_group_nj_forward.1
$region0: #{conv2d_group_nj_forward.1}
  #allocation0 [shape = 'u32[]', space=smem, size = 0x4, offset = 0x4, fixed_abs, tag = 'smem constant byte address 0x4 - core index']
  #allocation1 [shape = 'u32[144,128]{1,0:T(1,128)}', space=vmem, size = 0x12000, scoped, tag = 'internal scratch']
  %s0 = inlined_call_operand.vmem [shape: f32[2,200,128], index: 0, kind: input, shape index: {}]
  %s1 = inlined_call_operand.vmem [shape: f32[128,128], index: 1, kind: input, shape index: {}]
  %s2 = inlined_call_operand.vmem [shape: f32[128,128], index: 2, kind: input, shape index: {}]
  %s3 = inlined_call_operand.vmem [shape: f32[1,128], index: 3, kind: input, shape index: {}]
  %s4 = inlined_call_operand.vmem [shape: f32[1,128], index: 4, kind: input, shape index: {}]
  %s5 = inlined_call_operand.vmem [shape: f32[2,1,128], index: 5, kind: input, shape index: {}]
  %s6 = inlined_call_operand.vmem [shape: f32[2,200,128], index: 6, kind: input, shape index: {}]
  %s7 = inlined_call_operand.vmem [shape: f32[2,200,128], index: 7, kind: output, shape index: {}]
  %s8 = sld [smem:[#allocation0]]
  $region61: #{conv2d_group_nj_forward.1} parent=0
    _
  %s10 = ssub.s32 1, %s8
  %s11 = scalar_select 0, %s10, %s8
  loop: start=0, step=1, limit=4
  $region2: #{conv2d_group_nj_forward.1} parent=0 // loop_pre_header
    _
  $region3: #{conv2d_group_nj_forward.1} parent=0 // loop_header
    %s13 = sphi 0, %s17
    %p14 = scmp.ge.s32.totalorder %s13, 4
    %s20 = sphi 0, %s32
    %s21 = sphi 0, %s28
    %s22 = sphi 0, %s20
    %s23 = sphi 0, %s21
    %s24 = sphi 0, %s22
    %s25 = sphi 0, %s23
    %s37 = sphi 0, %s39
    %s40 = sphi 0, %s37
    %s41 = sphi 0, %s40
    %s57 = sphi 0, %s41
    %s61 = sphi 0, %s61
    %s63 = sphi 0, %s61
    %s64 = sphi 0, %s63
    %s78 = sphi 0, %s64
    %s82 = sphi 0, %s82
    %s84 = sphi 0, %s82
    %s85 = sphi 0, %s84
    %s99 = sphi 0, %s85
    %s103 = sphi 0, %s103
    %s105 = sphi 0, %s103
    %s106 = sphi 0, %s105
    %s120 = sphi 0, %s106
    %s124 = sphi 0, %s124
    %s126 = sphi 0, %s124
    %s127 = sphi 0, %s126
    %s141 = sphi 0, %s127
    %s147 = sphi 0, %s149
    %s150 = sphi 0, %s147
    %s151 = sphi 0, %s150
    %s167 = sphi 0, %s151
    %s175 = sphi 0, %s177
    %s178 = sphi 0, %s175
    %s179 = sphi 0, %s178
    %s195 = sphi 0, %s179
    %s203 = sphi 0, %s205
    %s206 = sphi 0, %s203
    %s207 = sphi 0, %s206
    %s223 = sphi 0, %s207
  $region4: #{conv2d_group_nj_forward.1} parent=0 // loop_header_branch
    %16 = sbr.rel (%p14) target = $region8
  $region5: #{conv2d_group_nj_forward.1} parent=0 // loop_body
    %s18 = ssub.s32 %s13, 1
    %s19 = ssub.s32 %s13, 2
    %s26 = sadd.s32 1, %s21
    %p27 = scmp.ge.s32.totalorder %s26, 1
    %s28 = scalar_select %p27, 0, %s26
    %s29 = sadd.s32 1, %s20
    %s30 = scalar_select %p27, %s29, %s20
    %p31 = scmp.ge.s32.totalorder %s30, 2
    %s32 = scalar_select %p31, 0, %s30
    %s33 = ssub.s32 %s20, %s32
    %s34 = ssub.s32 %s21, %s28
    %s35 = sor.u32 %s33, %s34
    %p36 = scmp.eq.s32.totalorder %s35, 0
    %s38 = sadd.s32 %s37, 1
    %s39 = scalar_select %p36, %s37, %s38
    %p42 = pneg %p36
    %p43 = scmp.eq.s32.totalorder %s13, 1
    %p44 = por %p42, %p43
    %p45 = scmp.ne.s32.totalorder %s37, %s40
    %p46 = scmp.eq.s32.totalorder %s13, 0
    %p47 = por %p45, %p46
    %p48 = scmp.ne.s32.totalorder %s37, %s40
    %p49 = scmp.eq.s32.totalorder %s18, 1
    %p50 = por %p48, %p49
    %p51 = scmp.ne.s32.totalorder %s40, %s41
    %p52 = scmp.eq.s32.totalorder %s18, 0
    %p53 = por %p51, %p52
    %p54 = scmp.ne.s32.totalorder %s40, %s41
    %p55 = scmp.eq.s32.totalorder %s19, 1
    %p56 = por %p54, %p55
    %p58 = scmp.ne.s32.totalorder %s41, %s57
    %p59 = scmp.eq.s32.totalorder %s19, 0
    %p60 = por %p58, %p59
    %s62 = sadd.s32 %s61, 1
    %p65 = scmp.eq.s32.totalorder %s13, 1
    %p66 = scmp.ne.s32.totalorder %s61, %s63
    %p67 = scmp.eq.s32.totalorder %s13, 0
    %p68 = por %p66, %p67
    %p69 = scmp.ne.s32.totalorder %s61, %s63
    %p70 = scmp.eq.s32.totalorder %s18, 1
    %p71 = por %p69, %p70
    %p72 = scmp.ne.s32.totalorder %s63, %s64
    %p73 = scmp.eq.s32.totalorder %s18, 0
    %p74 = por %p72, %p73
    %p75 = scmp.ne.s32.totalorder %s63, %s64
    %p76 = scmp.eq.s32.totalorder %s19, 1
    %p77 = por %p75, %p76
    %p79 = scmp.ne.s32.totalorder %s64, %s78
    %p80 = scmp.eq.s32.totalorder %s19, 0
    %p81 = por %p79, %p80
    %s83 = sadd.s32 %s82, 1
    %p86 = scmp.eq.s32.totalorder %s13, 1
    %p87 = scmp.ne.s32.totalorder %s82, %s84
    %p88 = scmp.eq.s32.totalorder %s13, 0
    %p89 = por %p87, %p88
    %p90 = scmp.ne.s32.totalorder %s82, %s84
    %p91 = scmp.eq.s32.totalorder %s18, 1
    %p92 = por %p90, %p91
    %p93 = scmp.ne.s32.totalorder %s84, %s85
    %p94 = scmp.eq.s32.totalorder %s18, 0
    %p95 = por %p93, %p94
    %p96 = scmp.ne.s32.totalorder %s84, %s85
    %p97 = scmp.eq.s32.totalorder %s19, 1
    %p98 = por %p96, %p97
    %p100 = scmp.ne.s32.totalorder %s85, %s99
    %p101 = scmp.eq.s32.totalorder %s19, 0
    %p102 = por %p100, %p101
    %s104 = sadd.s32 %s103, 1
    %p107 = scmp.eq.s32.totalorder %s13, 1
    %p108 = scmp.ne.s32.totalorder %s103, %s105
    %p109 = scmp.eq.s32.totalorder %s13, 0
    %p110 = por %p108, %p109
    %p111 = scmp.ne.s32.totalorder %s103, %s105
    %p112 = scmp.eq.s32.totalorder %s18, 1
    %p113 = por %p111, %p112
    %p114 = scmp.ne.s32.totalorder %s105, %s106
    %p115 = scmp.eq.s32.totalorder %s18, 0
    %p116 = por %p114, %p115
    %p117 = scmp.ne.s32.totalorder %s105, %s106
    %p118 = scmp.eq.s32.totalorder %s19, 1
    %p119 = por %p117, %p118
    %p121 = scmp.ne.s32.totalorder %s106, %s120
    %p122 = scmp.eq.s32.totalorder %s19, 0
    %p123 = por %p121, %p122
    %s125 = sadd.s32 %s124, 1
    %p128 = scmp.eq.s32.totalorder %s13, 1
    %p129 = scmp.ne.s32.totalorder %s124, %s126
    %p130 = scmp.eq.s32.totalorder %s13, 0
    %p131 = por %p129, %p130
    %p132 = scmp.ne.s32.totalorder %s124, %s126
    %p133 = scmp.eq.s32.totalorder %s18, 1
    %p134 = por %p132, %p133
    %p135 = scmp.ne.s32.totalorder %s126, %s127
    %p136 = scmp.eq.s32.totalorder %s18, 0
    %p137 = por %p135, %p136
    %p138 = scmp.ne.s32.totalorder %s126, %s127
    %p139 = scmp.eq.s32.totalorder %s19, 1
    %p140 = por %p138, %p139
    %p142 = scmp.ne.s32.totalorder %s127, %s141
    %p143 = scmp.eq.s32.totalorder %s19, 0
    %p144 = por %p142, %p143
    %s145 = ssub.s32 %s20, %s32
    %p146 = scmp.eq.s32.totalorder %s145, 0
    %s148 = sadd.s32 %s147, 1
    %s149 = scalar_select %p146, %s147, %s148
    %p152 = pneg %p146
    %p153 = scmp.eq.s32.totalorder %s13, 1
    %p154 = por %p152, %p153
    %p155 = scmp.ne.s32.totalorder %s147, %s150
    %p156 = scmp.eq.s32.totalorder %s13, 0
    %p157 = por %p155, %p156
    %p158 = scmp.ne.s32.totalorder %s147, %s150
    %p159 = scmp.eq.s32.totalorder %s18, 1
    %p160 = por %p158, %p159
    %p161 = scmp.ne.s32.totalorder %s150, %s151
    %p162 = scmp.eq.s32.totalorder %s18, 0
    %p163 = por %p161, %p162
    %p164 = scmp.ne.s32.totalorder %s150, %s151
    %p165 = scmp.eq.s32.totalorder %s19, 1
    %p166 = por %p164, %p165
    %p168 = scmp.ne.s32.totalorder %s151, %s167
    %p169 = scmp.eq.s32.totalorder %s19, 0
    %p170 = por %p168, %p169
    %s171 = ssub.s32 %s20, %s32
    %s172 = ssub.s32 %s21, %s28
    %s173 = sor.u32 %s171, %s172
    %p174 = scmp.eq.s32.totalorder %s173, 0
    %s176 = sadd.s32 %s175, 1
    %s177 = scalar_select %p174, %s175, %s176
    %p180 = pneg %p174
    %p181 = scmp.eq.s32.totalorder %s13, 1
    %p182 = por %p180, %p181
    %p183 = scmp.ne.s32.totalorder %s175, %s178
    %p184 = scmp.eq.s32.totalorder %s13, 0
    %p185 = por %p183, %p184
    %p186 = scmp.ne.s32.totalorder %s175, %s178
    %p187 = scmp.eq.s32.totalorder %s18, 1
    %p188 = por %p186, %p187
    %p189 = scmp.ne.s32.totalorder %s178, %s179
    %p190 = scmp.eq.s32.totalorder %s18, 0
    %p191 = por %p189, %p190
    %p192 = scmp.ne.s32.totalorder %s178, %s179
    %p193 = scmp.eq.s32.totalorder %s19, 1
    %p194 = por %p192, %p193
    %p196 = scmp.ne.s32.totalorder %s179, %s195
    %p197 = scmp.eq.s32.totalorder %s19, 0
    %p198 = por %p196, %p197
    %s199 = ssub.s32 %s20, %s32
    %s200 = ssub.s32 %s21, %s28
    %s201 = sor.u32 %s199, %s200
    %p202 = scmp.eq.s32.totalorder %s201, 0
    %s204 = sadd.s32 %s203, 1
    %s205 = scalar_select %p202, %s203, %s204
    %p208 = pneg %p202
    %p209 = scmp.eq.s32.totalorder %s13, 1
    %p210 = por %p208, %p209
    %p211 = scmp.ne.s32.totalorder %s203, %s206
    %p212 = scmp.eq.s32.totalorder %s13, 0
    %p213 = por %p211, %p212
    %p214 = scmp.ne.s32.totalorder %s203, %s206
    %p215 = scmp.eq.s32.totalorder %s18, 1
    %p216 = por %p214, %p215
    %p217 = scmp.ne.s32.totalorder %s206, %s207
    %p218 = scmp.eq.s32.totalorder %s18, 0
    %p219 = por %p217, %p218
    %p220 = scmp.ne.s32.totalorder %s206, %s207
    %p221 = scmp.eq.s32.totalorder %s19, 1
    %p222 = por %p220, %p221
    %p224 = scmp.ne.s32.totalorder %s207, %s223
    %p225 = scmp.eq.s32.totalorder %s19, 0
    %p226 = por %p224, %p225
    %p227 = scmp.le.s32.totalorder 1, %s13
    %p228 = scmp.lt.s32.totalorder %s13, 3
    %p229 = pnand %p227, %p228
    %p230 = pneg %p229
    // Predicated region
    $region9: #{conv2d_group_nj_forward.1} parent=5 // pred_check
      _
    $region10: #{conv2d_group_nj_forward.1} parent=5 // pred_check_branch
      %232 = sbr.rel (%p229) target = $region12
    $region11: #{conv2d_group_nj_forward.1} parent=5 // pred_region
      %s233 = ssub.s32 %s13, 1
      // Predicated region
      $region13: #{conv2d_group_nj_forward.1} parent=11 // pred_check
        %p234 = pneg %p74
      $region14: #{conv2d_group_nj_forward.1} parent=11 // pred_check_branch
        %236 = sbr.rel (%p234) target = $region16
      $region15: #{conv2d_group_nj_forward.1} parent=11 // pred_region
        _
      $region16: #{conv2d_group_nj_forward.1} parent=11 // pred_fallthru
        _
      // Predicated region
      $region17: #{conv2d_group_nj_forward.1} parent=11 // pred_check
        %p237 = pneg %p95
      $region18: #{conv2d_group_nj_forward.1} parent=11 // pred_check_branch
        %239 = sbr.rel (%p237) target = $region20
      $region19: #{conv2d_group_nj_forward.1} parent=11 // pred_region
        _
      $region20: #{conv2d_group_nj_forward.1} parent=11 // pred_fallthru
        _
      // Predicated region
      $region21: #{conv2d_group_nj_forward.1} parent=11 // pred_check
        %p240 = pneg %p116
      $region22: #{conv2d_group_nj_forward.1} parent=11 // pred_check_branch
        %242 = sbr.rel (%p240) target = $region24
      $region23: #{conv2d_group_nj_forward.1} parent=11 // pred_region
        _
      $region24: #{conv2d_group_nj_forward.1} parent=11 // pred_fallthru
        _
      // Predicated region
      $region25: #{conv2d_group_nj_forward.1} parent=11 // pred_check
        %p243 = pneg %p137
      $region26: #{conv2d_group_nj_forward.1} parent=11 // pred_check_branch
        %245 = sbr.rel (%p243) target = $region28
      $region27: #{conv2d_group_nj_forward.1} parent=11 // pred_region
        _
      $region28: #{conv2d_group_nj_forward.1} parent=11 // pred_fallthru
        _
    $region12: #{conv2d_group_nj_forward.1} parent=5 // pred_fallthru
      _
    %p246 = scmp.lt.s32.totalorder %s13, 2
    // Predicated region
    $region29: #{conv2d_group_nj_forward.1} parent=5 // pred_check
      %p247 = pneg %p246
    $region30: #{conv2d_group_nj_forward.1} parent=5 // pred_check_branch
      %249 = sbr.rel (%p247) target = $region32
    $region31: #{conv2d_group_nj_forward.1} parent=5 // pred_region
      // Predicated region
      $region33: #{conv2d_group_nj_forward.1} parent=31 // pred_check
        %p250 = pneg %p47
      $region34: #{conv2d_group_nj_forward.1} parent=31 // pred_check_branch
        %252 = sbr.rel (%p250) target = $region36
      $region35: #{conv2d_group_nj_forward.1} parent=31 // pred_region
        %s253 = smul.u32 25, %s21
        %p254 = scmp.lt.s32.totalorder %s20, 1
        %s255 = scalar_select %p254, %s20, 1
        %p256 = scmp.lt.s32.totalorder %s253, 24
        %s257 = scalar_select %p256, %s253, 24
        %s258 = smul.addr %s255, 25
        %s259 = sadd.s32 %s257, %s258
        %s260 = smul.addr %s259, 8
        %s261 = scalar_lea.vmem %s0, %s260
        %s262 = smul.u32 25, %s21
      $region36: #{conv2d_group_nj_forward.1} parent=31 // pred_fallthru
        _
      // Predicated region
      $region37: #{conv2d_group_nj_forward.1} parent=31 // pred_check
        %p263 = pneg %p157
      $region38: #{conv2d_group_nj_forward.1} parent=31 // pred_check_branch
        %265 = sbr.rel (%p263) target = $region40
      $region39: #{conv2d_group_nj_forward.1} parent=31 // pred_region
        %p266 = scmp.lt.s32.totalorder %s20, 1
        %s267 = scalar_select %p266, %s20, 1
        %s268 = scalar_lea.vmem %s5, %s267
      $region40: #{conv2d_group_nj_forward.1} parent=31 // pred_fallthru
        _
      // Predicated region
      $region41: #{conv2d_group_nj_forward.1} parent=31 // pred_check
        %p269 = pneg %p185
      $region42: #{conv2d_group_nj_forward.1} parent=31 // pred_check_branch
        %271 = sbr.rel (%p269) target = $region44
      $region43: #{conv2d_group_nj_forward.1} parent=31 // pred_region
        %s272 = smul.u32 25, %s21
        %p273 = scmp.lt.s32.totalorder %s20, 1
        %s274 = scalar_select %p273, %s20, 1
        %p275 = scmp.lt.s32.totalorder %s272, 24
        %s276 = scalar_select %p275, %s272, 24
        %s277 = smul.addr %s274, 25
        %s278 = sadd.s32 %s276, %s277
        %s279 = smul.addr %s278, 8
        %s280 = scalar_lea.vmem %s6, %s279
        %s281 = smul.u32 25, %s21
      $region44: #{conv2d_group_nj_forward.1} parent=31 // pred_fallthru
        _
    $region32: #{conv2d_group_nj_forward.1} parent=5 // pred_fallthru
      _
    %p282 = scmp.le.s32.totalorder 1, %s13
    %p283 = scmp.lt.s32.totalorder %s13, 3
    %p284 = pnand %p282, %p283
    %p285 = pneg %p284
    // Predicated region
    $region45: #{conv2d_group_nj_forward.1} parent=5 // pred_check
      _
    $region46: #{conv2d_group_nj_forward.1} parent=5 // pred_check_branch
      %287 = sbr.rel (%p284) target = $region48
    $region47: #{conv2d_group_nj_forward.1} parent=5 // pred_region
      %s288 = ssub.s32 %s13, 1
      %s289 = smul.u32 25, %s23
      %p290 = scmp.lt.s32.totalorder %s22, 1
      %s291 = scalar_select %p290, %s22, 1
      %p292 = scmp.lt.s32.totalorder %s289, 24
      %s293 = scalar_select %p292, %s289, 24
      %s294 = smul.addr %s291, 25
      %s295 = sadd.s32 %s293, %s294
      %s296 = smul.addr %s295, 8
      %s297 = scalar_lea.vmem %s0, %s296
      %p298 = pneg %p53
      %p299 = pneg %p50
      %p300 = pneg %p74
      %p301 = pneg %p71
      %p302 = pneg %p95
      %p303 = pneg %p92
      %p304 = pneg %p116
      %p305 = pneg %p113
      %p306 = pneg %p137
      %p307 = pneg %p134
      %p308 = scmp.lt.s32.totalorder %s22, 1
      %s309 = scalar_select %p308, %s22, 1
      %s310 = scalar_lea.vmem %s5, %s309
      %p311 = pneg %p163
      %p312 = pneg %p160
      %s313 = smul.u32 25, %s23
      %p314 = scmp.lt.s32.totalorder %s22, 1
      %s315 = scalar_select %p314, %s22, 1
      %p316 = scmp.lt.s32.totalorder %s313, 24
      %s317 = scalar_select %p316, %s313, 24
      %s318 = smul.addr %s315, 25
      %s319 = sadd.s32 %s317, %s318
      %s320 = smul.addr %s319, 8
      %s321 = scalar_lea.vmem %s6, %s320
      %p322 = pneg %p191
      %p323 = pneg %p188
      %p324 = pneg %p219
      %p325 = pneg %p216
      %s326 = smul.u32 25, %s23
      %p327 = scmp.lt.s32.totalorder %s22, 1
      %s328 = scalar_select %p327, %s22, 1
      %p329 = scmp.lt.s32.totalorder %s326, 24
      %s330 = scalar_select %p329, %s326, 24
      %s331 = smul.addr %s328, 25
      %s332 = sadd.s32 %s330, %s331
      %s333 = smul.addr %s332, 8
      %s334 = scalar_lea.vmem %s7, %s333
      %s335 = smul.u32 25, %s23
      %p336 = scmp.lt.s32.totalorder %s22, 1
      %s337 = scalar_select %p336, %s22, 1
      %p338 = scmp.lt.s32.totalorder %s335, 24
      %s339 = scalar_select %p338, %s335, 24
      %s340 = smul.addr %s337, 25
      %s341 = sadd.s32 %s339, %s340
      %s342 = smul.addr %s341, 8
      %s343 = scalar_lea.vmem %s0, %s342
      %s344 = smul.u32 25, %s23
      %p345 = scmp.lt.s32.totalorder %s22, 1
      %s346 = scalar_select %p345, %s22, 1
      %s347 = scalar_lea.vmem %s5, %s346
      %s348 = smul.u32 25, %s23
      %p349 = scmp.lt.s32.totalorder %s22, 1
      %s350 = scalar_select %p349, %s22, 1
      %p351 = scmp.lt.s32.totalorder %s348, 24
      %s352 = scalar_select %p351, %s348, 24
      %s353 = smul.addr %s350, 25
      %s354 = sadd.s32 %s352, %s353
      %s355 = smul.addr %s354, 8
      %s356 = scalar_lea.vmem %s6, %s355
      %s357 = smul.u32 25, %s23
      %s358 = smul.u32 25, %s23
      %p359 = scmp.lt.s32.totalorder %s22, 1
      %s360 = scalar_select %p359, %s22, 1
      %p361 = scmp.lt.s32.totalorder %s358, 24
      %s362 = scalar_select %p361, %s358, 24
      %s363 = smul.addr %s360, 25
      %s364 = sadd.s32 %s362, %s363
      %s365 = smul.addr %s364, 8
      %s366 = scalar_lea.vmem %s7, %s365
      %s367 = smul.u32 25, %s23
      %v368 = vld [vmem:[%s343] sm:$0xff]
      %v369 = vld [vmem:[%s343 + $0x8] sm:$0xff]
      %v370 = vld [vmem:[%s343 + $0x10] sm:$0xff]
      %v371 = vld [vmem:[%s343 + $0x18] sm:$0xff]
      %v372 = vld [vmem:[%s343 + $0x20] sm:$0xff]
      %v373 = vld [vmem:[%s343 + $0x28] sm:$0xff]
      %v374 = vld [vmem:[%s343 + $0x30] sm:$0xff]
      %v375 = vld [vmem:[%s343 + $0x38] sm:$0xff]
      %v376 = vld [vmem:[%s343 + $0x40] sm:$0xff]
      %v377 = vld [vmem:[%s343 + $0x48] sm:$0xff]
      %v378 = vld [vmem:[%s343 + $0x50] sm:$0xff]
      %v379 = vld [vmem:[%s343 + $0x58] sm:$0xff]
      %v380 = vld [vmem:[%s343 + $0x60] sm:$0xff]
      %v381 = vld [vmem:[%s343 + $0x68] sm:$0xff]
      %v382 = vld [vmem:[%s343 + $0x70] sm:$0xff]
      %v383 = vld [vmem:[%s343 + $0x78] sm:$0xff]
      %v384 = vld [vmem:[%s343 + $0x80] sm:$0xff]
      %v385 = vld [vmem:[%s343 + $0x88] sm:$0xff]
      %v386 = vld [vmem:[%s343 + $0x90] sm:$0xff]
      %v387 = vld [vmem:[%s343 + $0x98] sm:$0xff]
      %v388 = vld [vmem:[%s343 + $0xa0] sm:$0xff]
      %v389 = vld [vmem:[%s343 + $0xa8] sm:$0xff]
      %v390 = vld [vmem:[%s343 + $0xb0] sm:$0xff]
      %v391 = vld [vmem:[%s343 + $0xb8] sm:$0xff]
      %v392 = vld [vmem:[%s343 + $0xc0] sm:$0xff]
      %v393 = vld [vmem:[%s1] sm:$0xff]
      %v394 = vld [vmem:[%s1 + $0x8] sm:$0xff]
      %v395 = vld [vmem:[%s1 + $0x10] sm:$0xff]
      %v396 = vld [vmem:[%s1 + $0x18] sm:$0xff]
      %v397 = vld [vmem:[%s1 + $0x20] sm:$0xff]
      %v398 = vld [vmem:[%s1 + $0x28] sm:$0xff]
      %v399 = vld [vmem:[%s1 + $0x30] sm:$0xff]
      %v400 = vld [vmem:[%s1 + $0x38] sm:$0xff]
      %v401 = vld [vmem:[%s1 + $0x40] sm:$0xff]
      %v402 = vld [vmem:[%s1 + $0x48] sm:$0xff]
      %v403 = vld [vmem:[%s1 + $0x50] sm:$0xff]
      %v404 = vld [vmem:[%s1 + $0x58] sm:$0xff]
      %v405 = vld [vmem:[%s1 + $0x60] sm:$0xff]
      %v406 = vld [vmem:[%s1 + $0x68] sm:$0xff]
      %v407 = vld [vmem:[%s1 + $0x70] sm:$0xff]
      %v408 = vld [vmem:[%s1 + $0x78] sm:$0xff]
      %v409 = vld [vmem:[%s3] sm:$0x1]
      %v411 = vlaneseq
      %v412 = vshrl.u32 %v411, 7
      %v413 = vsub.s32 0, %v412
      %v414 = vrot.slane %v409, %v413
      %416 = vmatprep.subr.mxu0 0.0
      %417 = vmatpush1.msra.mxu0 %v393
      %418 = vmatprep.subr.mxu0 0.0
      %419 = vmatpush1.msra.mxu0 %v394
      %420 = vmatprep.subr.mxu0 0.0
      %421 = vmatpush1.msra.mxu0 %v395
      %422 = vmatprep.subr.mxu0 0.0
      %423 = vmatpush1.msra.mxu0 %v396
      %424 = vmatprep.subr.mxu0 0.0
      %425 = vmatpush1.msra.mxu0 %v397
      %426 = vmatprep.subr.mxu0 0.0
      %427 = vmatpush1.msra.mxu0 %v398
      %428 = vmatprep.subr.mxu0 0.0
      %429 = vmatpush1.msra.mxu0 %v399
      %430 = vmatprep.subr.mxu0 0.0
      %431 = vmatpush1.msra.mxu0 %v400
      %432 = vmatprep.subr.mxu0 0.0
      %433 = vmatpush1.msra.mxu0 %v401
      %434 = vmatprep.subr.mxu0 0.0
      %435 = vmatpush1.msra.mxu0 %v402
      %436 = vmatprep.subr.mxu0 0.0
      %437 = vmatpush1.msra.mxu0 %v403
      %438 = vmatprep.subr.mxu0 0.0
      %439 = vmatpush1.msra.mxu0 %v404
      %440 = vmatprep.subr.mxu0 0.0
      %441 = vmatpush1.msra.mxu0 %v405
      %442 = vmatprep.subr.mxu0 0.0
      %443 = vmatpush1.msra.mxu0 %v406
      %444 = vmatprep.subr.mxu0 0.0
      %445 = vmatpush1.msra.mxu0 %v407
      %446 = vmatprep.subr.mxu0 0.0
      %447 = vmatpush1.msra.mxu0 %v408
      %448 = vmatprep.subr.mxu0 0.0
      %449 = vmatpush1.msra.mxu0 0.0
      %450 = vmatprep.subr.mxu0 0.0
      %451 = vmatpush1.msra.mxu0 0.0
      %452 = vmatprep.subr.mxu0 0.0
      %453 = vmatpush1.msra.mxu0 0.0
      %454 = vmatprep.subr.mxu0 0.0
      %455 = vmatpush1.msra.mxu0 0.0
      %456 = vmatprep.subr.mxu0 0.0
      %457 = vmatpush1.msra.mxu0 0.0
      %458 = vmatprep.subr.mxu0 0.0
      %459 = vmatpush1.msra.mxu0 0.0
      %460 = vmatprep.subr.mxu0 0.0
      %461 = vmatpush1.msra.mxu0 0.0
      %462 = vmatprep.subr.mxu0 0.0
      %463 = vmatpush1.msra.mxu0 0.0
      %464 = vmatprep.subr.mxu0 0.0
      %465 = vmatpush1.msra.mxu0 0.0
      %466 = vmatprep.subr.mxu0 0.0
      %467 = vmatpush1.msra.mxu0 0.0
      %468 = vmatprep.subr.mxu0 0.0
      %469 = vmatpush1.msra.mxu0 0.0
      %470 = vmatprep.subr.mxu0 0.0
      %471 = vmatpush1.msra.mxu0 0.0
      %472 = vmatprep.subr.mxu0 0.0
      %473 = vmatpush1.msra.mxu0 0.0
      %474 = vmatprep.subr.mxu0 0.0
      %475 = vmatpush1.msra.mxu0 0.0
      %476 = vmatprep.subr.mxu0 0.0
      %477 = vmatpush1.msra.mxu0 0.0
      %478 = vmatprep.subr.mxu0 0.0
      %479 = vmatpush1.msra.mxu0 0.0
      %480 = vmatprep.mubr.f32.mxu0 0.0
      %481 = vmatmul.mubr.f32.gmra.mrb[0].mxu0 %v368
      %v482 = vpop.f32.mrb[0].mxu0
      %v483 = vadd.f32 %v414, %v482
      %v484 = vpop.f32.mrb[0].mxu0
      %485 = vmatprep.mubr.f32.mxu0 0.0
      %486 = vmatmul.mubr.f32.gmra.mrb[0].mxu0 %v369
      %v487 = vpop.f32.mrb[0].mxu0
      %v488 = vadd.f32 %v414, %v487
      %v489 = vpop.f32.mrb[0].mxu0
      %490 = vmatprep.mubr.f32.mxu0 0.0
      %491 = vmatmul.mubr.f32.gmra.mrb[0].mxu0 %v370
      %v492 = vpop.f32.mrb[0].mxu0
      %v493 = vadd.f32 %v414, %v492
      %v494 = vpop.f32.mrb[0].mxu0
      %495 = vmatprep.mubr.f32.mxu0 0.0
      %496 = vmatmul.mubr.f32.gmra.mrb[0].mxu0 %v371
      %v497 = vpop.f32.mrb[0].mxu0
      %v498 = vadd.f32 %v414, %v497
      %v499 = vpop.f32.mrb[0].mxu0
      %500 = vmatprep.mubr.f32.mxu0 0.0
      %501 = vmatmul.mubr.f32.gmra.mrb[0].mxu0 %v372
      %v502 = vpop.f32.mrb[0].mxu0
      %v503 = vadd.f32 %v414, %v502
      %v504 = vpop.f32.mrb[0].mxu0
      %505 = vmatprep.mubr.f32.mxu0 0.0
      %506 = vmatmul.mubr.f32.gmra.mrb[0].mxu0 %v373
      %v507 = vpop.f32.mrb[0].mxu0
      %v508 = vadd.f32 %v414, %v507
      %v509 = vpop.f32.mrb[0].mxu0
      %510 = vmatprep.mubr.f32.mxu0 0.0
      %511 = vmatmul.mubr.f32.gmra.mrb[0].mxu0 %v374
      %v512 = vpop.f32.mrb[0].mxu0
      %v513 = vadd.f32 %v414, %v512
      %v514 = vpop.f32.mrb[0].mxu0
      %515 = vmatprep.mubr.f32.mxu0 0.0
      %516 = vmatmul.mubr.f32.gmra.mrb[0].mxu0 %v375
      %v517 = vpop.f32.mrb[0].mxu0
      %v518 = vadd.f32 %v414, %v517
      %v519 = vpop.f32.mrb[0].mxu0
      %520 = vmatprep.mubr.f32.mxu0 0.0
      %521 = vmatmul.mubr.f32.gmra.mrb[0].mxu0 %v376
      %v522 = vpop.f32.mrb[0].mxu0
      %v523 = vadd.f32 %v414, %v522
      %v524 = vpop.f32.mrb[0].mxu0
      %525 = vmatprep.mubr.f32.mxu0 0.0
      %526 = vmatmul.mubr.f32.gmra.mrb[0].mxu0 %v377
      %v527 = vpop.f32.mrb[0].mxu0
      %v528 = vadd.f32 %v414, %v527
      %v529 = vpop.f32.mrb[0].mxu0
      %530 = vmatprep.mubr.f32.mxu0 0.0
      %531 = vmatmul.mubr.f32.gmra.mrb[0].mxu0 %v378
      %v532 = vpop.f32.mrb[0].mxu0
      %v533 = vadd.f32 %v414, %v532
      %v534 = vpop.f32.mrb[0].mxu0
      %535 = vmatprep.mubr.f32.mxu0 0.0
      %536 = vmatmul.mubr.f32.gmra.mrb[0].mxu0 %v379
      %v537 = vpop.f32.mrb[0].mxu0
      %v538 = vadd.f32 %v414, %v537
      %v539 = vpop.f32.mrb[0].mxu0
      %540 = vmatprep.mubr.f32.mxu0 0.0
      %541 = vmatmul.mubr.f32.gmra.mrb[0].mxu0 %v380
      %v542 = vpop.f32.mrb[0].mxu0
      %v543 = vadd.f32 %v414, %v542
      %v544 = vpop.f32.mrb[0].mxu0
      %545 = vmatprep.mubr.f32.mxu0 0.0
      %546 = vmatmul.mubr.f32.gmra.mrb[0].mxu0 %v381
      %v547 = vpop.f32.mrb[0].mxu0
      %v548 = vadd.f32 %v414, %v547
      %v549 = vpop.f32.mrb[0].mxu0
      %550 = vmatprep.mubr.f32.mxu0 0.0
      %551 = vmatmul.mubr.f32.gmra.mrb[0].mxu0 %v382
      %v552 = vpop.f32.mrb[0].mxu0
      %v553 = vadd.f32 %v414, %v552
      %v554 = vpop.f32.mrb[0].mxu0
      %555 = vmatprep.mubr.f32.mxu0 0.0
      %556 = vmatmul.mubr.f32.gmra.mrb[0].mxu0 %v383
      %v557 = vpop.f32.mrb[0].mxu0
      %v558 = vadd.f32 %v414, %v557
      %v559 = vpop.f32.mrb[0].mxu0
      %560 = vmatprep.mubr.f32.mxu0 0.0
      %561 = vmatmul.mubr.f32.gmra.mrb[0].mxu0 %v384
      %v562 = vpop.f32.mrb[0].mxu0
      %v563 = vadd.f32 %v414, %v562
      %v564 = vpop.f32.mrb[0].mxu0
      %565 = vmatprep.mubr.f32.mxu0 0.0
      %566 = vmatmul.mubr.f32.gmra.mrb[0].mxu0 %v385
      %v567 = vpop.f32.mrb[0].mxu0
      %v568 = vadd.f32 %v414, %v567
      %v569 = vpop.f32.mrb[0].mxu0
      %570 = vmatprep.mubr.f32.mxu0 0.0
      %571 = vmatmul.mubr.f32.gmra.mrb[0].mxu0 %v386
      %v572 = vpop.f32.mrb[0].mxu0
      %v573 = vadd.f32 %v414, %v572
      %v574 = vpop.f32.mrb[0].mxu0
      %575 = vmatprep.mubr.f32.mxu0 0.0
      %576 = vmatmul.mubr.f32.gmra.mrb[0].mxu0 %v387
      %v577 = vpop.f32.mrb[0].mxu0
      %v578 = vadd.f32 %v414, %v577
      %v579 = vpop.f32.mrb[0].mxu0
      %580 = vmatprep.mubr.f32.mxu0 0.0
      %581 = vmatmul.mubr.f32.gmra.mrb[0].mxu0 %v388
      %v582 = vpop.f32.mrb[0].mxu0
      %v583 = vadd.f32 %v414, %v582
      %v584 = vpop.f32.mrb[0].mxu0
      %585 = vmatprep.mubr.f32.mxu0 0.0
      %586 = vmatmul.mubr.f32.gmra.mrb[0].mxu0 %v389
      %v587 = vpop.f32.mrb[0].mxu0
      %v588 = vadd.f32 %v414, %v587
      %v589 = vpop.f32.mrb[0].mxu0
      %590 = vmatprep.mubr.f32.mxu0 0.0
      %591 = vmatmul.mubr.f32.gmra.mrb[0].mxu0 %v390
      %v592 = vpop.f32.mrb[0].mxu0
      %v593 = vadd.f32 %v414, %v592
      %v594 = vpop.f32.mrb[0].mxu0
      %595 = vmatprep.mubr.f32.mxu0 0.0
      %596 = vmatmul.mubr.f32.gmra.mrb[0].mxu0 %v391
      %v597 = vpop.f32.mrb[0].mxu0
      %v598 = vadd.f32 %v414, %v597
      %v599 = vpop.f32.mrb[0].mxu0
      %600 = vmatprep.mubr.f32.mxu0 0.0
      %601 = vmatmul.mubr.f32.gmra.mrb[0].mxu0 %v392
      %v602 = vpop.f32.mrb[0].mxu0
      %v603 = vadd.f32 %v414, %v602
      %v604 = vpop.f32.mrb[0].mxu0
      %605 = vdwg.mxu0
      %v606 = vmul.f32 %v368, %v368
      %v607 = vmul.f32 %v369, %v369
      %v608 = vmul.f32 %v370, %v370
      %v609 = vmul.f32 %v371, %v371
      %v610 = vmul.f32 %v372, %v372
      %v611 = vmul.f32 %v373, %v373
      %v612 = vmul.f32 %v374, %v374
      %v613 = vmul.f32 %v375, %v375
      %v614 = vmul.f32 %v376, %v376
      %v615 = vmul.f32 %v377, %v377
      %v616 = vmul.f32 %v378, %v378
      %v617 = vmul.f32 %v379, %v379
      %v618 = vmul.f32 %v380, %v380
      %v619 = vmul.f32 %v381, %v381
      %v620 = vmul.f32 %v382, %v382
      %v621 = vmul.f32 %v383, %v383
      %v622 = vmul.f32 %v384, %v384
      %v623 = vmul.f32 %v385, %v385
      %v624 = vmul.f32 %v386, %v386
      %v625 = vmul.f32 %v387, %v387
      %v626 = vmul.f32 %v388, %v388
      %v627 = vmul.f32 %v389, %v389
      %v628 = vmul.f32 %v390, %v390
      %v629 = vmul.f32 %v391, %v391
      %v630 = vmul.f32 %v392, %v392
      %v631 = vld [vmem:[%s2] sm:$0xff]
      %v632 = vld [vmem:[%s2 + $0x8] sm:$0xff]
      %v633 = vld [vmem:[%s2 + $0x10] sm:$0xff]
      %v634 = vld [vmem:[%s2 + $0x18] sm:$0xff]
      %v635 = vld [vmem:[%s2 + $0x20] sm:$0xff]
      %v636 = vld [vmem:[%s2 + $0x28] sm:$0xff]
      %v637 = vld [vmem:[%s2 + $0x30] sm:$0xff]
      %v638 = vld [vmem:[%s2 + $0x38] sm:$0xff]
      %v639 = vld [vmem:[%s2 + $0x40] sm:$0xff]
      %v640 = vld [vmem:[%s2 + $0x48] sm:$0xff]
      %v641 = vld [vmem:[%s2 + $0x50] sm:$0xff]
      %v642 = vld [vmem:[%s2 + $0x58] sm:$0xff]
      %v643 = vld [vmem:[%s2 + $0x60] sm:$0xff]
      %v644 = vld [vmem:[%s2 + $0x68] sm:$0xff]
      %v645 = vld [vmem:[%s2 + $0x70] sm:$0xff]
      %v646 = vld [vmem:[%s2 + $0x78] sm:$0xff]
      %v647 = vld [vmem:[%s4] sm:$0x1]
      %v649 = vlaneseq
      %v650 = vshrl.u32 %v649, 7
      %v651 = vsub.s32 0, %v650
      %v652 = vrot.slane %v647, %v651
      %654 = vmatprep.subr.mxu0 0.0
      %655 = vmatpush1.msra.mxu0 %v631
      %656 = vmatprep.subr.mxu0 0.0
      %657 = vmatpush1.msra.mxu0 %v632
      %658 = vmatprep.subr.mxu0 0.0
      %659 = vmatpush1.msra.mxu0 %v633
      %660 = vmatprep.subr.mxu0 0.0
      %661 = vmatpush1.msra.mxu0 %v634
      %662 = vmatprep.subr.mxu0 0.0
      %663 = vmatpush1.msra.mxu0 %v635
      %664 = vmatprep.subr.mxu0 0.0
      %665 = vmatpush1.msra.mxu0 %v636
      %666 = vmatprep.subr.mxu0 0.0
      %667 = vmatpush1.msra.mxu0 %v637
      %668 = vmatprep.subr.mxu0 0.0
      %669 = vmatpush1.msra.mxu0 %v638
      %670 = vmatprep.subr.mxu0 0.0
      %671 = vmatpush1.msra.mxu0 %v639
      %672 = vmatprep.subr.mxu0 0.0
      %673 = vmatpush1.msra.mxu0 %v640
      %674 = vmatprep.subr.mxu0 0.0
      %675 = vmatpush1.msra.mxu0 %v641
      %676 = vmatprep.subr.mxu0 0.0
      %677 = vmatpush1.msra.mxu0 %v642
      %678 = vmatprep.subr.mxu0 0.0
      %679 = vmatpush1.msra.mxu0 %v643
      %680 = vmatprep.subr.mxu0 0.0
      %681 = vmatpush1.msra.mxu0 %v644
      %682 = vmatprep.subr.mxu0 0.0
      %683 = vmatpush1.msra.mxu0 %v645
      %684 = vmatprep.subr.mxu0 0.0
      %685 = vmatpush1.msra.mxu0 %v646
      %686 = vmatprep.subr.mxu0 0.0
      %687 = vmatpush1.msra.mxu0 0.0
      %688 = vmatprep.subr.mxu0 0.0
      %689 = vmatpush1.msra.mxu0 0.0
      %690 = vmatprep.subr.mxu0 0.0
      %691 = vmatpush1.msra.mxu0 0.0
      %692 = vmatprep.subr.mxu0 0.0
      %693 = vmatpush1.msra.mxu0 0.0
      %694 = vmatprep.subr.mxu0 0.0
      %695 = vmatpush1.msra.mxu0 0.0
      %696 = vmatprep.subr.mxu0 0.0
      %697 = vmatpush1.msra.mxu0 0.0
      %698 = vmatprep.subr.mxu0 0.0
      %699 = vmatpush1.msra.mxu0 0.0
      %700 = vmatprep.subr.mxu0 0.0
      %701 = vmatpush1.msra.mxu0 0.0
      %702 = vmatprep.subr.mxu0 0.0
      %703 = vmatpush1.msra.mxu0 0.0
      %704 = vmatprep.subr.mxu0 0.0
      %705 = vmatpush1.msra.mxu0 0.0
      %706 = vmatprep.subr.mxu0 0.0
      %707 = vmatpush1.msra.mxu0 0.0
      %708 = vmatprep.subr.mxu0 0.0
      %709 = vmatpush1.msra.mxu0 0.0
      %710 = vmatprep.subr.mxu0 0.0
      %711 = vmatpush1.msra.mxu0 0.0
      %712 = vmatprep.subr.mxu0 0.0
      %713 = vmatpush1.msra.mxu0 0.0
      %714 = vmatprep.subr.mxu0 0.0
      %715 = vmatpush1.msra.mxu0 0.0
      %716 = vmatprep.subr.mxu0 0.0
      %717 = vmatpush1.msra.mxu0 0.0
      %718 = vmatprep.mubr.f32.mxu0 0.0
      %719 = vmatmul.mubr.f32.gmra.mrb[0].mxu0 %v606
      %v720 = vpop.f32.mrb[0].mxu0
      %v721 = vadd.f32 %v652, %v720
      %v722 = vpop.f32.mrb[0].mxu0
      %723 = vmatprep.mubr.f32.mxu0 0.0
      %724 = vmatmul.mubr.f32.gmra.mrb[0].mxu0 %v607
      %v725 = vpop.f32.mrb[0].mxu0
      %v726 = vadd.f32 %v652, %v725
      %v727 = vpop.f32.mrb[0].mxu0
      %728 = vmatprep.mubr.f32.mxu0 0.0
      %729 = vmatmul.mubr.f32.gmra.mrb[0].mxu0 %v608
      %v730 = vpop.f32.mrb[0].mxu0
      %v731 = vadd.f32 %v652, %v730
      %v732 = vpop.f32.mrb[0].mxu0
      %733 = vmatprep.mubr.f32.mxu0 0.0
      %734 = vmatmul.mubr.f32.gmra.mrb[0].mxu0 %v609
      %v735 = vpop.f32.mrb[0].mxu0
      %v736 = vadd.f32 %v652, %v735
      %v737 = vpop.f32.mrb[0].mxu0
      %738 = vmatprep.mubr.f32.mxu0 0.0
      %739 = vmatmul.mubr.f32.gmra.mrb[0].mxu0 %v610
      %v740 = vpop.f32.mrb[0].mxu0
      %v741 = vadd.f32 %v652, %v740
      %v742 = vpop.f32.mrb[0].mxu0
      %743 = vmatprep.mubr.f32.mxu0 0.0
      %744 = vmatmul.mubr.f32.gmra.mrb[0].mxu0 %v611
      %v745 = vpop.f32.mrb[0].mxu0
      %v746 = vadd.f32 %v652, %v745
      %v747 = vpop.f32.mrb[0].mxu0
      %748 = vmatprep.mubr.f32.mxu0 0.0
      %749 = vmatmul.mubr.f32.gmra.mrb[0].mxu0 %v612
      %v750 = vpop.f32.mrb[0].mxu0
      %v751 = vadd.f32 %v652, %v750
      %v752 = vpop.f32.mrb[0].mxu0
      %753 = vmatprep.mubr.f32.mxu0 0.0
      %754 = vmatmul.mubr.f32.gmra.mrb[0].mxu0 %v613
      %v755 = vpop.f32.mrb[0].mxu0
      %v756 = vadd.f32 %v652, %v755
      %v757 = vpop.f32.mrb[0].mxu0
      %758 = vmatprep.mubr.f32.mxu0 0.0
      %759 = vmatmul.mubr.f32.gmra.mrb[0].mxu0 %v614
      %v760 = vpop.f32.mrb[0].mxu0
      %v761 = vadd.f32 %v652, %v760
      %v762 = vpop.f32.mrb[0].mxu0
      %763 = vmatprep.mubr.f32.mxu0 0.0
      %764 = vmatmul.mubr.f32.gmra.mrb[0].mxu0 %v615
      %v765 = vpop.f32.mrb[0].mxu0
      %v766 = vadd.f32 %v652, %v765
      %v767 = vpop.f32.mrb[0].mxu0
      %768 = vmatprep.mubr.f32.mxu0 0.0
      %769 = vmatmul.mubr.f32.gmra.mrb[0].mxu0 %v616
      %v770 = vpop.f32.mrb[0].mxu0
      %v771 = vadd.f32 %v652, %v770
      %v772 = vpop.f32.mrb[0].mxu0
      %773 = vmatprep.mubr.f32.mxu0 0.0
      %774 = vmatmul.mubr.f32.gmra.mrb[0].mxu0 %v617
      %v775 = vpop.f32.mrb[0].mxu0
      %v776 = vadd.f32 %v652, %v775
      %v777 = vpop.f32.mrb[0].mxu0
      %778 = vmatprep.mubr.f32.mxu0 0.0
      %779 = vmatmul.mubr.f32.gmra.mrb[0].mxu0 %v618
      %v780 = vpop.f32.mrb[0].mxu0
      %v781 = vadd.f32 %v652, %v780
      %v782 = vpop.f32.mrb[0].mxu0
      %783 = vmatprep.mubr.f32.mxu0 0.0
      %784 = vmatmul.mubr.f32.gmra.mrb[0].mxu0 %v619
      %v785 = vpop.f32.mrb[0].mxu0
      %v786 = vadd.f32 %v652, %v785
      %v787 = vpop.f32.mrb[0].mxu0
      %788 = vmatprep.mubr.f32.mxu0 0.0
      %789 = vmatmul.mubr.f32.gmra.mrb[0].mxu0 %v620
      %v790 = vpop.f32.mrb[0].mxu0
      %v791 = vadd.f32 %v652, %v790
      %v792 = vpop.f32.mrb[0].mxu0
      %793 = vmatprep.mubr.f32.mxu0 0.0
      %794 = vmatmul.mubr.f32.gmra.mrb[0].mxu0 %v621
      %v795 = vpop.f32.mrb[0].mxu0
      %v796 = vadd.f32 %v652, %v795
      %v797 = vpop.f32.mrb[0].mxu0
      %798 = vmatprep.mubr.f32.mxu0 0.0
      %799 = vmatmul.mubr.f32.gmra.mrb[0].mxu0 %v622
      %v800 = vpop.f32.mrb[0].mxu0
      %v801 = vadd.f32 %v652, %v800
      %v802 = vpop.f32.mrb[0].mxu0
      %803 = vmatprep.mubr.f32.mxu0 0.0
      %804 = vmatmul.mubr.f32.gmra.mrb[0].mxu0 %v623
      %v805 = vpop.f32.mrb[0].mxu0
      %v806 = vadd.f32 %v652, %v805
      %v807 = vpop.f32.mrb[0].mxu0
      %808 = vmatprep.mubr.f32.mxu0 0.0
      %809 = vmatmul.mubr.f32.gmra.mrb[0].mxu0 %v624
      %v810 = vpop.f32.mrb[0].mxu0
      %v811 = vadd.f32 %v652, %v810
      %v812 = vpop.f32.mrb[0].mxu0
      %813 = vmatprep.mubr.f32.mxu0 0.0
      %814 = vmatmul.mubr.f32.gmra.mrb[0].mxu0 %v625
      %v815 = vpop.f32.mrb[0].mxu0
      %v816 = vadd.f32 %v652, %v815
      %v817 = vpop.f32.mrb[0].mxu0
      %818 = vmatprep.mubr.f32.mxu0 0.0
      %819 = vmatmul.mubr.f32.gmra.mrb[0].mxu0 %v626
      %v820 = vpop.f32.mrb[0].mxu0
      %v821 = vadd.f32 %v652, %v820
      %v822 = vpop.f32.mrb[0].mxu0
      %823 = vmatprep.mubr.f32.mxu0 0.0
      %824 = vmatmul.mubr.f32.gmra.mrb[0].mxu0 %v627
      %v825 = vpop.f32.mrb[0].mxu0
      %v826 = vadd.f32 %v652, %v825
      %v827 = vpop.f32.mrb[0].mxu0
      %828 = vmatprep.mubr.f32.mxu0 0.0
      %829 = vmatmul.mubr.f32.gmra.mrb[0].mxu0 %v628
      %v830 = vpop.f32.mrb[0].mxu0
      %v831 = vadd.f32 %v652, %v830
      %v832 = vpop.f32.mrb[0].mxu0
      %833 = vmatprep.mubr.f32.mxu0 0.0
      %834 = vmatmul.mubr.f32.gmra.mrb[0].mxu0 %v629
      %v835 = vpop.f32.mrb[0].mxu0
      %v836 = vadd.f32 %v652, %v835
      %v837 = vpop.f32.mrb[0].mxu0
      %838 = vmatprep.mubr.f32.mxu0 0.0
      %839 = vmatmul.mubr.f32.gmra.mrb[0].mxu0 %v630
      %v840 = vpop.f32.mrb[0].mxu0
      %v841 = vadd.f32 %v652, %v840
      %v842 = vpop.f32.mrb[0].mxu0
      %843 = vdwg.mxu0
      %v844 = vld [vmem:[%s347] sm:$0x1]
      %v845 = vand.u32 2147483647, %v844
      %v846 = vrsqrt.pop %v721
      %v847 = vmul.f32 %v721, %v846
      %vm848 = vcmp.eq.f32.partialorder %v721, inf
      %v849 = vsel %vm848, %v721, %v847
      %vm850 = vcmp.eq.f32.partialorder %v721, 0.0
      %v851 = vand.u32 %v721, 2147483648
      %v852 = vsel %vm850, %v851, %v849
      %v853 = vrsqrt.pop %v726
      %v854 = vmul.f32 %v726, %v853
      %vm855 = vcmp.eq.f32.partialorder %v726, inf
      %v856 = vsel %vm855, %v726, %v854
      %vm857 = vcmp.eq.f32.partialorder %v726, 0.0
      %v858 = vand.u32 %v726, 2147483648
      %v859 = vsel %vm857, %v858, %v856
      %v860 = vrsqrt.pop %v731
      %v861 = vmul.f32 %v731, %v860
      %vm862 = vcmp.eq.f32.partialorder %v731, inf
      %v863 = vsel %vm862, %v731, %v861
      %vm864 = vcmp.eq.f32.partialorder %v731, 0.0
      %v865 = vand.u32 %v731, 2147483648
      %v866 = vsel %vm864, %v865, %v863
      %v867 = vrsqrt.pop %v736
      %v868 = vmul.f32 %v736, %v867
      %vm869 = vcmp.eq.f32.partialorder %v736, inf
      %v870 = vsel %vm869, %v736, %v868
      %vm871 = vcmp.eq.f32.partialorder %v736, 0.0
      %v872 = vand.u32 %v736, 2147483648
      %v873 = vsel %vm871, %v872, %v870
      %v874 = vrsqrt.pop %v741
      %v875 = vmul.f32 %v741, %v874
      %vm876 = vcmp.eq.f32.partialorder %v741, inf
      %v877 = vsel %vm876, %v741, %v875
      %vm878 = vcmp.eq.f32.partialorder %v741, 0.0
      %v879 = vand.u32 %v741, 2147483648
      %v880 = vsel %vm878, %v879, %v877
      %v881 = vrsqrt.pop %v746
      %v882 = vmul.f32 %v746, %v881
      %vm883 = vcmp.eq.f32.partialorder %v746, inf
      %v884 = vsel %vm883, %v746, %v882
      %vm885 = vcmp.eq.f32.partialorder %v746, 0.0
      %v886 = vand.u32 %v746, 2147483648
      %v887 = vsel %vm885, %v886, %v884
      %v888 = vrsqrt.pop %v751
      %v889 = vmul.f32 %v751, %v888
      %vm890 = vcmp.eq.f32.partialorder %v751, inf
      %v891 = vsel %vm890, %v751, %v889
      %vm892 = vcmp.eq.f32.partialorder %v751, 0.0
      %v893 = vand.u32 %v751, 2147483648
      %v894 = vsel %vm892, %v893, %v891
      %v895 = vrsqrt.pop %v756
      %v896 = vmul.f32 %v756, %v895
      %vm897 = vcmp.eq.f32.partialorder %v756, inf
      %v898 = vsel %vm897, %v756, %v896
      %vm899 = vcmp.eq.f32.partialorder %v756, 0.0
      %v900 = vand.u32 %v756, 2147483648
      %v901 = vsel %vm899, %v900, %v898
      %v902 = vrsqrt.pop %v761
      %v903 = vmul.f32 %v761, %v902
      %vm904 = vcmp.eq.f32.partialorder %v761, inf
      %v905 = vsel %vm904, %v761, %v903
      %vm906 = vcmp.eq.f32.partialorder %v761, 0.0
      %v907 = vand.u32 %v761, 2147483648
      %v908 = vsel %vm906, %v907, %v905
      %v909 = vrsqrt.pop %v766
      %v910 = vmul.f32 %v766, %v909
      %vm911 = vcmp.eq.f32.partialorder %v766, inf
      %v912 = vsel %vm911, %v766, %v910
      %vm913 = vcmp.eq.f32.partialorder %v766, 0.0
      %v914 = vand.u32 %v766, 2147483648
      %v915 = vsel %vm913, %v914, %v912
      %v916 = vrsqrt.pop %v771
      %v917 = vmul.f32 %v771, %v916
      %vm918 = vcmp.eq.f32.partialorder %v771, inf
      %v919 = vsel %vm918, %v771, %v917
      %vm920 = vcmp.eq.f32.partialorder %v771, 0.0
      %v921 = vand.u32 %v771, 2147483648
      %v922 = vsel %vm920, %v921, %v919
      %v923 = vrsqrt.pop %v776
      %v924 = vmul.f32 %v776, %v923
      %vm925 = vcmp.eq.f32.partialorder %v776, inf
      %v926 = vsel %vm925, %v776, %v924
      %vm927 = vcmp.eq.f32.partialorder %v776, 0.0
      %v928 = vand.u32 %v776, 2147483648
      %v929 = vsel %vm927, %v928, %v926
      %v930 = vrsqrt.pop %v781
      %v931 = vmul.f32 %v781, %v930
      %vm932 = vcmp.eq.f32.partialorder %v781, inf
      %v933 = vsel %vm932, %v781, %v931
      %vm934 = vcmp.eq.f32.partialorder %v781, 0.0
      %v935 = vand.u32 %v781, 2147483648
      %v936 = vsel %vm934, %v935, %v933
      %v937 = vrsqrt.pop %v786
      %v938 = vmul.f32 %v786, %v937
      %vm939 = vcmp.eq.f32.partialorder %v786, inf
      %v940 = vsel %vm939, %v786, %v938
      %vm941 = vcmp.eq.f32.partialorder %v786, 0.0
      %v942 = vand.u32 %v786, 2147483648
      %v943 = vsel %vm941, %v942, %v940
      %v944 = vrsqrt.pop %v791
      %v945 = vmul.f32 %v791, %v944
      %vm946 = vcmp.eq.f32.partialorder %v791, inf
      %v947 = vsel %vm946, %v791, %v945
      %vm948 = vcmp.eq.f32.partialorder %v791, 0.0
      %v949 = vand.u32 %v791, 2147483648
      %v950 = vsel %vm948, %v949, %v947
      %v951 = vrsqrt.pop %v796
      %v952 = vmul.f32 %v796, %v951
      %vm953 = vcmp.eq.f32.partialorder %v796, inf
      %v954 = vsel %vm953, %v796, %v952
      %vm955 = vcmp.eq.f32.partialorder %v796, 0.0
      %v956 = vand.u32 %v796, 2147483648
      %v957 = vsel %vm955, %v956, %v954
      %v958 = vrsqrt.pop %v801
      %v959 = vmul.f32 %v801, %v958
      %vm960 = vcmp.eq.f32.partialorder %v801, inf
      %v961 = vsel %vm960, %v801, %v959
      %vm962 = vcmp.eq.f32.partialorder %v801, 0.0
      %v963 = vand.u32 %v801, 2147483648
      %v964 = vsel %vm962, %v963, %v961
      %v965 = vrsqrt.pop %v806
      %v966 = vmul.f32 %v806, %v965
      %vm967 = vcmp.eq.f32.partialorder %v806, inf
      %v968 = vsel %vm967, %v806, %v966
      %vm969 = vcmp.eq.f32.partialorder %v806, 0.0
      %v970 = vand.u32 %v806, 2147483648
      %v971 = vsel %vm969, %v970, %v968
      %v972 = vrsqrt.pop %v811
      %v973 = vmul.f32 %v811, %v972
      %vm974 = vcmp.eq.f32.partialorder %v811, inf
      %v975 = vsel %vm974, %v811, %v973
      %vm976 = vcmp.eq.f32.partialorder %v811, 0.0
      %v977 = vand.u32 %v811, 2147483648
      %v978 = vsel %vm976, %v977, %v975
      %v979 = vrsqrt.pop %v816
      %v980 = vmul.f32 %v816, %v979
      %vm981 = vcmp.eq.f32.partialorder %v816, inf
      %v982 = vsel %vm981, %v816, %v980
      %vm983 = vcmp.eq.f32.partialorder %v816, 0.0
      %v984 = vand.u32 %v816, 2147483648
      %v985 = vsel %vm983, %v984, %v982
      %v986 = vrsqrt.pop %v821
      %v987 = vmul.f32 %v821, %v986
      %vm988 = vcmp.eq.f32.partialorder %v821, inf
      %v989 = vsel %vm988, %v821, %v987
      %vm990 = vcmp.eq.f32.partialorder %v821, 0.0
      %v991 = vand.u32 %v821, 2147483648
      %v992 = vsel %vm990, %v991, %v989
      %v993 = vrsqrt.pop %v826
      %v994 = vmul.f32 %v826, %v993
      %vm995 = vcmp.eq.f32.partialorder %v826, inf
      %v996 = vsel %vm995, %v826, %v994
      %vm997 = vcmp.eq.f32.partialorder %v826, 0.0
      %v998 = vand.u32 %v826, 2147483648
      %v999 = vsel %vm997, %v998, %v996
      %v1000 = vrsqrt.pop %v831
      %v1001 = vmul.f32 %v831, %v1000
      %vm1002 = vcmp.eq.f32.partialorder %v831, inf
      %v1003 = vsel %vm1002, %v831, %v1001
      %vm1004 = vcmp.eq.f32.partialorder %v831, 0.0
      %v1005 = vand.u32 %v831, 2147483648
      %v1006 = vsel %vm1004, %v1005, %v1003
      %v1007 = vrsqrt.pop %v836
      %v1008 = vmul.f32 %v836, %v1007
      %vm1009 = vcmp.eq.f32.partialorder %v836, inf
      %v1010 = vsel %vm1009, %v836, %v1008
      %vm1011 = vcmp.eq.f32.partialorder %v836, 0.0
      %v1012 = vand.u32 %v836, 2147483648
      %v1013 = vsel %vm1011, %v1012, %v1010
      %v1014 = vrsqrt.pop %v841
      %v1015 = vmul.f32 %v841, %v1014
      %vm1016 = vcmp.eq.f32.partialorder %v841, inf
      %v1017 = vsel %vm1016, %v841, %v1015
      %vm1018 = vcmp.eq.f32.partialorder %v841, 0.0
      %v1019 = vand.u32 %v841, 2147483648
      %v1020 = vsel %vm1018, %v1019, %v1017
      %v1022 = vlaneseq
      %v1023 = vshrl.u32 %v1022, 7
      %v1024 = vsub.s32 0, %v1023
      %v1025 = vrot.slane %v845, %v1024
      %v1027 = vmul.f32 %v1025, %v852
      %v1028 = vmul.f32 %v1025, %v859
      %v1029 = vmul.f32 %v1025, %v866
      %v1030 = vmul.f32 %v1025, %v873
      %v1031 = vmul.f32 %v1025, %v880
      %v1032 = vmul.f32 %v1025, %v887
      %v1033 = vmul.f32 %v1025, %v894
      %v1034 = vmul.f32 %v1025, %v901
      %v1035 = vmul.f32 %v1025, %v908
      %v1036 = vmul.f32 %v1025, %v915
      %v1037 = vmul.f32 %v1025, %v922
      %v1038 = vmul.f32 %v1025, %v929
      %v1039 = vmul.f32 %v1025, %v936
      %v1040 = vmul.f32 %v1025, %v943
      %v1041 = vmul.f32 %v1025, %v950
      %v1042 = vmul.f32 %v1025, %v957
      %v1043 = vmul.f32 %v1025, %v964
      %v1044 = vmul.f32 %v1025, %v971
      %v1045 = vmul.f32 %v1025, %v978
      %v1046 = vmul.f32 %v1025, %v985
      %v1047 = vmul.f32 %v1025, %v992
      %v1048 = vmul.f32 %v1025, %v999
      %v1049 = vmul.f32 %v1025, %v1006
      %v1050 = vmul.f32 %v1025, %v1013
      %v1051 = vmul.f32 %v1025, %v1020
      %v1053 = vlaneseq
      %v1054 = vshrl.u32 %v1053, 7
      %v1055 = vsub.s32 0, %v1054
      %v1056 = vrot.slane %v844, %v1055
      %v1058 = vmul.f32 %v483, %v1056
      %v1059 = vmul.f32 %v488, %v1056
      %v1060 = vmul.f32 %v493, %v1056
      %v1061 = vmul.f32 %v498, %v1056
      %v1062 = vmul.f32 %v503, %v1056
      %v1063 = vmul.f32 %v508, %v1056
      %v1064 = vmul.f32 %v513, %v1056
      %v1065 = vmul.f32 %v518, %v1056
      %v1066 = vmul.f32 %v523, %v1056
      %v1067 = vmul.f32 %v528, %v1056
      %v1068 = vmul.f32 %v533, %v1056
      %v1069 = vmul.f32 %v538, %v1056
      %v1070 = vmul.f32 %v543, %v1056
      %v1071 = vmul.f32 %v548, %v1056
      %v1072 = vmul.f32 %v553, %v1056
      %v1073 = vmul.f32 %v558, %v1056
      %v1074 = vmul.f32 %v563, %v1056
      %v1075 = vmul.f32 %v568, %v1056
      %v1076 = vmul.f32 %v573, %v1056
      %v1077 = vmul.f32 %v578, %v1056
      %v1078 = vmul.f32 %v583, %v1056
      %v1079 = vmul.f32 %v588, %v1056
      %v1080 = vmul.f32 %v593, %v1056
      %v1081 = vmul.f32 %v598, %v1056
      %v1082 = vmul.f32 %v603, %v1056
      %v1083 = vld [vmem:[%s356] sm:$0xff]
      %v1084 = vld [vmem:[%s356 + $0x8] sm:$0xff]
      %v1085 = vld [vmem:[%s356 + $0x10] sm:$0xff]
      %v1086 = vld [vmem:[%s356 + $0x18] sm:$0xff]
      %v1087 = vld [vmem:[%s356 + $0x20] sm:$0xff]
      %v1088 = vld [vmem:[%s356 + $0x28] sm:$0xff]
      %v1089 = vld [vmem:[%s356 + $0x30] sm:$0xff]
      %v1090 = vld [vmem:[%s356 + $0x38] sm:$0xff]
      %v1091 = vld [vmem:[%s356 + $0x40] sm:$0xff]
      %v1092 = vld [vmem:[%s356 + $0x48] sm:$0xff]
      %v1093 = vld [vmem:[%s356 + $0x50] sm:$0xff]
      %v1094 = vld [vmem:[%s356 + $0x58] sm:$0xff]
      %v1095 = vld [vmem:[%s356 + $0x60] sm:$0xff]
      %v1096 = vld [vmem:[%s356 + $0x68] sm:$0xff]
      %v1097 = vld [vmem:[%s356 + $0x70] sm:$0xff]
      %v1098 = vld [vmem:[%s356 + $0x78] sm:$0xff]
      %v1099 = vld [vmem:[%s356 + $0x80] sm:$0xff]
      %v1100 = vld [vmem:[%s356 + $0x88] sm:$0xff]
      %v1101 = vld [vmem:[%s356 + $0x90] sm:$0xff]
      %v1102 = vld [vmem:[%s356 + $0x98] sm:$0xff]
      %v1103 = vld [vmem:[%s356 + $0xa0] sm:$0xff]
      %v1104 = vld [vmem:[%s356 + $0xa8] sm:$0xff]
      %v1105 = vld [vmem:[%s356 + $0xb0] sm:$0xff]
      %v1106 = vld [vmem:[%s356 + $0xb8] sm:$0xff]
      %v1107 = vld [vmem:[%s356 + $0xc0] sm:$0xff]
      %v1108 = vmul.f32 %v1083, %v1027
      %v1109 = vmul.f32 %v1084, %v1028
      %v1110 = vmul.f32 %v1085, %v1029
      %v1111 = vmul.f32 %v1086, %v1030
      %v1112 = vmul.f32 %v1087, %v1031
      %v1113 = vmul.f32 %v1088, %v1032
      %v1114 = vmul.f32 %v1089, %v1033
      %v1115 = vmul.f32 %v1090, %v1034
      %v1116 = vmul.f32 %v1091, %v1035
      %v1117 = vmul.f32 %v1092, %v1036
      %v1118 = vmul.f32 %v1093, %v1037
      %v1119 = vmul.f32 %v1094, %v1038
      %v1120 = vmul.f32 %v1095, %v1039
      %v1121 = vmul.f32 %v1096, %v1040
      %v1122 = vmul.f32 %v1097, %v1041
      %v1123 = vmul.f32 %v1098, %v1042
      %v1124 = vmul.f32 %v1099, %v1043
      %v1125 = vmul.f32 %v1100, %v1044
      %v1126 = vmul.f32 %v1101, %v1045
      %v1127 = vmul.f32 %v1102, %v1046
      %v1128 = vmul.f32 %v1103, %v1047
      %v1129 = vmul.f32 %v1104, %v1048
      %v1130 = vmul.f32 %v1105, %v1049
      %v1131 = vmul.f32 %v1106, %v1050
      %v1132 = vmul.f32 %v1107, %v1051
      %v1133 = vadd.f32 %v1058, %v1108
      %v1134 = vadd.f32 %v1059, %v1109
      %v1135 = vadd.f32 %v1060, %v1110
      %v1136 = vadd.f32 %v1061, %v1111
      %v1137 = vadd.f32 %v1062, %v1112
      %v1138 = vadd.f32 %v1063, %v1113
      %v1139 = vadd.f32 %v1064, %v1114
      %v1140 = vadd.f32 %v1065, %v1115
      %v1141 = vadd.f32 %v1066, %v1116
      %v1142 = vadd.f32 %v1067, %v1117
      %v1143 = vadd.f32 %v1068, %v1118
      %v1144 = vadd.f32 %v1069, %v1119
      %v1145 = vadd.f32 %v1070, %v1120
      %v1146 = vadd.f32 %v1071, %v1121
      %v1147 = vadd.f32 %v1072, %v1122
      %v1148 = vadd.f32 %v1073, %v1123
      %v1149 = vadd.f32 %v1074, %v1124
      %v1150 = vadd.f32 %v1075, %v1125
      %v1151 = vadd.f32 %v1076, %v1126
      %v1152 = vadd.f32 %v1077, %v1127
      %v1153 = vadd.f32 %v1078, %v1128
      %v1154 = vadd.f32 %v1079, %v1129
      %v1155 = vadd.f32 %v1080, %v1130
      %v1156 = vadd.f32 %v1081, %v1131
      %v1157 = vadd.f32 %v1082, %v1132
      %1158 = vst [vmem:[%s366] sm:$0xff] %v1133
      %1159 = vst [vmem:[%s366 + $0x8] sm:$0xff] %v1134
      %1160 = vst [vmem:[%s366 + $0x10] sm:$0xff] %v1135
      %1161 = vst [vmem:[%s366 + $0x18] sm:$0xff] %v1136
      %1162 = vst [vmem:[%s366 + $0x20] sm:$0xff] %v1137
      %1163 = vst [vmem:[%s366 + $0x28] sm:$0xff] %v1138
      %1164 = vst [vmem:[%s366 + $0x30] sm:$0xff] %v1139
      %1165 = vst [vmem:[%s366 + $0x38] sm:$0xff] %v1140
      %1166 = vst [vmem:[%s366 + $0x40] sm:$0xff] %v1141
      %1167 = vst [vmem:[%s366 + $0x48] sm:$0xff] %v1142
      %1168 = vst [vmem:[%s366 + $0x50] sm:$0xff] %v1143
      %1169 = vst [vmem:[%s366 + $0x58] sm:$0xff] %v1144
      %1170 = vst [vmem:[%s366 + $0x60] sm:$0xff] %v1145
      %1171 = vst [vmem:[%s366 + $0x68] sm:$0xff] %v1146
      %1172 = vst [vmem:[%s366 + $0x70] sm:$0xff] %v1147
      %1173 = vst [vmem:[%s366 + $0x78] sm:$0xff] %v1148
      %1174 = vst [vmem:[%s366 + $0x80] sm:$0xff] %v1149
      %1175 = vst [vmem:[%s366 + $0x88] sm:$0xff] %v1150
      %1176 = vst [vmem:[%s366 + $0x90] sm:$0xff] %v1151
      %1177 = vst [vmem:[%s366 + $0x98] sm:$0xff] %v1152
      %1178 = vst [vmem:[%s366 + $0xa0] sm:$0xff] %v1153
      %1179 = vst [vmem:[%s366 + $0xa8] sm:$0xff] %v1154
      %1180 = vst [vmem:[%s366 + $0xb0] sm:$0xff] %v1155
      %1181 = vst [vmem:[%s366 + $0xb8] sm:$0xff] %v1156
      %1182 = vst [vmem:[%s366 + $0xc0] sm:$0xff] %v1157
      %s1183 = smul.u32 25, %s23
      %p1184 = scmp.lt.s32.totalorder %s22, 1
      %s1185 = scalar_select %p1184, %s22, 1
      %p1186 = scmp.lt.s32.totalorder %s1183, 24
      %s1187 = scalar_select %p1186, %s1183, 24
      %s1188 = smul.addr %s1185, 25
      %s1189 = sadd.s32 %s1187, %s1188
      %s1190 = smul.addr %s1189, 8
      %s1191 = scalar_lea.vmem %s7, %s1190
      // Predicated region
      $region49: #{conv2d_group_nj_forward.1} parent=47 // pred_check
        %p1192 = pneg %p216
      $region50: #{conv2d_group_nj_forward.1} parent=47 // pred_check_branch
        %1194 = sbr.rel (%p1192) target = $region52
      $region51: #{conv2d_group_nj_forward.1} parent=47 // pred_region
        %s1195 = smul.u32 25, %s23
      $region52: #{conv2d_group_nj_forward.1} parent=47 // pred_fallthru
        _
    $region48: #{conv2d_group_nj_forward.1} parent=5 // pred_fallthru
      _
    %p1196 = scmp.le.s32.totalorder 2, %s13
    // Predicated region
    $region53: #{conv2d_group_nj_forward.1} parent=5 // pred_check
      %p1197 = pneg %p1196
    $region54: #{conv2d_group_nj_forward.1} parent=5 // pred_check_branch
      %1199 = sbr.rel (%p1197) target = $region56
    $region55: #{conv2d_group_nj_forward.1} parent=5 // pred_region
      %s1200 = ssub.s32 %s13, 2
      // Predicated region
      $region57: #{conv2d_group_nj_forward.1} parent=55 // pred_check
        %p1201 = pneg %p222
      $region58: #{conv2d_group_nj_forward.1} parent=55 // pred_check_branch
        %1203 = sbr.rel (%p1201) target = $region60
      $region59: #{conv2d_group_nj_forward.1} parent=55 // pred_region
        %s1204 = smul.u32 25, %s25
        %p1205 = scmp.lt.s32.totalorder %s24, 1
        %s1206 = scalar_select %p1205, %s24, 1
        %p1207 = scmp.lt.s32.totalorder %s1204, 24
        %s1208 = scalar_select %p1207, %s1204, 24
        %s1209 = smul.addr %s1206, 25
        %s1210 = sadd.s32 %s1208, %s1209
        %s1211 = smul.addr %s1210, 8
        %s1212 = scalar_lea.vmem %s7, %s1211
      $region60: #{conv2d_group_nj_forward.1} parent=55 // pred_fallthru
        _
    $region56: #{conv2d_group_nj_forward.1} parent=5 // pred_fallthru
      _
  $region6: #{conv2d_group_nj_forward.1} parent=0 // loop_footer
    %s17 = sadd.s32 1, %s13
  $region7: #{conv2d_group_nj_forward.1} parent=0 // loop_footer_branch
    %12 = sbr.rel target = $region3
  $region8: #{conv2d_group_nj_forward.1} parent=0 // loop_exit
    _

</llo_original>
